<compile_context>
chip_gen: v7x
topology: tpu7x:2x2x1
jax: 0.10.0
libtpu: 0.0.40
codegen_flags: <defaults>
</compile_context>

<pallas_src>
import jax
import jax.numpy as jnp
from jax.experimental import pallas as pl
from jax.experimental.pallas import tpu as pltpu

EPS = 1e-5
LANES = 128


def _round_up(x, m):
    return (x + m - 1) // m * m


def _conv_stats_kernel(p_ref, w_ref, stats_ref):
    """Conv matmul for one M-tile + per-tile partial BN statistics (f32)."""
    acc = jnp.dot(p_ref[...], w_ref[...], preferred_element_type=jnp.float32)
    # Per-tile partials (finalized once outside the grid); keeping the reduction
    # per-tile is what lets the M axis be tiled and marked "parallel".
    s1 = jnp.sum(acc, axis=0, keepdims=True)        # (1, C_pad)
    s2 = jnp.sum(acc * acc, axis=0, keepdims=True)  # (1, C_pad)
    stats_ref[...] = jnp.concatenate([s1, s2], axis=0)[None]


def _conv_bn_relu_kernel(p_ref, w_ref, scale_ref, shift_ref, o_ref):
    """Conv matmul for one M-tile + fused BN affine + ReLU (lane-dense store)."""
    acc = jnp.dot(p_ref[...], w_ref[...], preferred_element_type=jnp.float32)
    y = acc * scale_ref[...] + shift_ref[...]
    o_ref[...] = jnp.maximum(y, 0.0).astype(o_ref.dtype)


def conv_block(x_nchw, weight, bias, gamma, beta, *, kernel_size=3, tile_m=512,
               compute_dtype=jnp.float32):
    """ConvBlock forward. x_nchw: (N,Cin,H,W) f32; weight: (Cout,Cin,kh,kw) OIHW."""
    del bias  # exactly cancelled by BatchNorm's per-channel mean subtraction
    N, Cin, H, W = x_nchw.shape
    Cout = weight.shape[0]
    kh = kw = kernel_size
    ph = (kh - 1) // 2  # 'same' padding, stride 1, odd kernel

    # ---- glue: im2col (plain JAX) ----
    # TODO(synk): fuse im2col into the kernel (halo'd NHWC tile, 9 shifted matmuls).
    x_nhwc = jnp.transpose(x_nchw, (0, 2, 3, 1))
    xp = jnp.pad(x_nhwc, ((0, 0), (ph, ph), (ph, ph), (0, 0)))
    cols = [xp[:, i:i + H, j:j + W, :] for i in range(kh) for j in range(kw)]
    K = kh * kw * Cin
    M = N * H * W
    patches = jnp.concatenate(cols, axis=-1).reshape(M, K)

    # Lane-dense output: zero-pad Cout to a full 128-lane vreg width.
    c_pad = _round_up(max(Cout, LANES), LANES)
    w2d = jnp.transpose(weight, (2, 3, 1, 0)).reshape(K, Cout)  # matches patch order
    w2d = jnp.pad(w2d, ((0, 0), (0, c_pad - Cout)))

    # M tiling. Padded rows are all-zero patches -> zero conv output (no bias), so
    # they contribute nothing to the BN sums; we divide by the true M below.
    tile_m = max(8, _round_up(min(tile_m, M), 8))
    m_pad = _round_up(M, tile_m)
    num_tiles = m_pad // tile_m
    patches = jnp.pad(patches, ((0, m_pad - M), (0, 0))).astype(compute_dtype)
    w2d = w2d.astype(compute_dtype)

    itemsize = jnp.dtype(compute_dtype).itemsize
    compiler_params = pltpu.CompilerParams(
        dimension_semantics=("parallel",),      # engages both TensorCores on v7x
        vmem_limit_bytes=48 * 1024 * 1024,      # explicit, with headroom under 64 MiB
    )

    # ---- pass 1: conv + per-tile partial BN statistics ----
    stats = pl.pallas_call(
        _conv_stats_kernel,
        out_shape=jax.ShapeDtypeStruct((num_tiles, 2, c_pad), jnp.float32),
        grid=(num_tiles,),
        in_specs=[
            pl.BlockSpec((tile_m, K), lambda t: (t, 0)),
            pl.BlockSpec((K, c_pad), lambda t: (0, 0)),
        ],
        out_specs=pl.BlockSpec((1, 2, c_pad), lambda t: (t, 0, 0)),
        compiler_params=compiler_params,
        cost_estimate=pl.CostEstimate(
            flops=2 * m_pad * K * c_pad + 4 * m_pad * c_pad,
            transcendentals=0,
            bytes_accessed=m_pad * K * itemsize + K * c_pad * itemsize
            + num_tiles * 2 * c_pad * 4),
    )(patches, w2d)

    # ---- tiny finalize in plain JAX: batch mean/var -> fused scale/shift (f32) ----
    s1 = jnp.sum(stats[:, 0, :], axis=0)
    s2 = jnp.sum(stats[:, 1, :], axis=0)
    mean = s1 / M
    var = jnp.maximum(s2 / M - mean * mean, 0.0)   # biased var (PyTorch train fwd)
    inv = jax.lax.rsqrt(var + EPS)
    gamma_p = jnp.pad(gamma.astype(jnp.float32), (0, c_pad - Cout))
    beta_p = jnp.pad(beta.astype(jnp.float32), (0, c_pad - Cout))
    scale = (gamma_p * inv).reshape(1, c_pad)
    shift = (beta_p - mean * gamma_p * inv).reshape(1, c_pad)

    # ---- pass 2: recompute conv per tile, apply scale/shift + ReLU ----
    out2d = pl.pallas_call(
        _conv_bn_relu_kernel,
        out_shape=jax.ShapeDtypeStruct((m_pad, c_pad), jnp.float32),
        grid=(num_tiles,),
        in_specs=[
            pl.BlockSpec((tile_m, K), lambda t: (t, 0)),
            pl.BlockSpec((K, c_pad), lambda t: (0, 0)),
            pl.BlockSpec((1, c_pad), lambda t: (0, 0)),
            pl.BlockSpec((1, c_pad), lambda t: (0, 0)),
        ],
        out_specs=pl.BlockSpec((tile_m, c_pad), lambda t: (t, 0)),
        compiler_params=compiler_params,
        cost_estimate=pl.CostEstimate(
            flops=2 * m_pad * K * c_pad + 3 * m_pad * c_pad,
            transcendentals=0,
            bytes_accessed=m_pad * K * itemsize + K * c_pad * itemsize
            + 2 * c_pad * 4 + m_pad * c_pad * 4),
    )(patches, w2d, scale, shift)

    # back to NCHW, dropping M / channel padding
    out = out2d[:M, :Cout].reshape(N, H, W, Cout)
    return jnp.transpose(out, (0, 3, 1, 2))


def conv_block_reference(x_nchw, weight, bias, gamma, beta):
    """Pure-JAX reference replicating the PyTorch module forward (training mode)."""
    y = jax.lax.conv_general_dilated(
        x_nchw, weight, window_strides=(1, 1), padding="SAME",
        dimension_numbers=("NCHW", "OIHW", "NCHW"))
    y = y + bias[None, :, None, None]
    mean = jnp.mean(y, axis=(0, 2, 3), keepdims=True)
    var = jnp.mean((y - mean) ** 2, axis=(0, 2, 3), keepdims=True)   # biased var
    y = (y - mean) * jax.lax.rsqrt(var + EPS)
    y = y * gamma[None, :, None, None] + beta[None, :, None, None]
    return jnp.maximum(y, 0.0)


if __name__ == "__main__":
    # small shapes consistent with ConvBlock(in_c=4, out_c=8, kernel_size=3)
    N, Cin, Cout, H, W = 2, 4, 8, 16, 16

    key = jax.random.PRNGKey(0)
    kx, kw_, kb, kg, kbeta = jax.random.split(key, 5)
    x = jax.random.normal(kx, (N, Cin, H, W), dtype=jnp.float32)
    weight = jax.random.normal(kw_, (Cout, Cin, 3, 3), dtype=jnp.float32) * 0.1
    bias = jax.random.normal(kb, (Cout,), dtype=jnp.float32) * 0.1   # nonzero: proves BN cancels it
    gamma = 1.0 + 0.1 * jax.random.normal(kg, (Cout,), dtype=jnp.float32)
    beta = 0.1 * jax.random.normal(kbeta, (Cout,), dtype=jnp.float32)

    ref = jax.block_until_ready(conv_block_reference(x, weight, bias, gamma, beta))

    # f32 MXU-input path (bit-faithful to the PyTorch module) — strict tolerance.
    # tile_m=128 -> 4 grid steps, exercising the tiled / two-phase path.
    out = jax.block_until_ready(
        conv_block(x, weight, bias, gamma, beta, tile_m=128,
                   compute_dtype=jnp.float32))
    assert out.shape == (N, Cout, H, W)
    err = float(jnp.max(jnp.abs(out - ref)))
    assert jnp.allclose(out, ref, rtol=1e-4, atol=2e-4), err

    # bf16 MXU-input path (v6e/v7x production setting; f32 accumulate + f32 BN).
    out_bf16 = jax.block_until_ready(
        conv_block(x, weight, bias, gamma, beta, tile_m=128,
                   compute_dtype=jnp.bfloat16))
    err_bf16 = float(jnp.max(jnp.abs(out_bf16 - ref)))
    assert jnp.allclose(out_bf16, ref, rtol=5e-2, atol=5e-2), err_bf16

    print("KERNEL_OK")
</pallas_src>

<mosaic_0001>
module attributes {stable_mosaic.version = 11 : i64} {
  func.func @_conv_stats_kernel(%arg0: i32, %arg1: memref<128x36xf32, #tpu.memory_space<vmem>>, %arg2: memref<36x128xf32, #tpu.memory_space<vmem>>, %arg3: memref<1x2x128xf32, #tpu.memory_space<vmem>>) attributes {dimension_semantics = [#tpu.dimension_semantics<parallel>], iteration_bounds = array<i64: 4>, scalar_prefetch = 0 : i64, scratch_operands = 0 : i64, tpu.core_type = #tpu.core_type<tc>, window_params = [{transform_indices = @transform_0, window_bounds = array<i64: 128, 36>}, {pipeline_mode = #tpu.pipeline_mode<synchronous>, transform_indices = @transform_1, window_bounds = array<i64: 36, 128>}, {transform_indices = @transform_2, window_bounds = array<i64: 1, 2, 128>}]} {
    %c0 = arith.constant 0 : index
    %c0_0 = arith.constant 0 : index
    %0 = vector.load %arg1[%c0, %c0_0] : memref<128x36xf32, #tpu.memory_space<vmem>>, vector<128x36xf32>
    %c0_1 = arith.constant 0 : index
    %c0_2 = arith.constant 0 : index
    %1 = vector.load %arg2[%c0_1, %c0_2] : memref<36x128xf32, #tpu.memory_space<vmem>>, vector<36x128xf32>
    %cst = arith.constant dense<0.000000e+00> : vector<128x128xf32>
    %2 = tpu.matmul %0, %1, %cst {dimension_numbers = #tpu.dot_dimension_numbers<[1], [0], [0], [1], [0, 0, 1, 1], [], []>} : vector<128x36xf32>, vector<36x128xf32>, vector<128x128xf32> -> vector<128x128xf32>
    %cst_3 = arith.constant dense<0.000000e+00> : vector<128xf32>
    %3 = vector.multi_reduction <add>, %2, %cst_3 [0] : vector<128x128xf32> to vector<128xf32>
    %4 = vector.shape_cast %3 : vector<128xf32> to vector<1x128xf32>
    %5 = arith.mulf %2, %2 : vector<128x128xf32>
    %cst_4 = arith.constant dense<0.000000e+00> : vector<128xf32>
    %6 = vector.multi_reduction <add>, %5, %cst_4 [0] : vector<128x128xf32> to vector<128xf32>
    %7 = vector.shape_cast %6 : vector<128xf32> to vector<1x128xf32>
    %8 = tpu.concatenate %4, %7 in 0 : vector<1x128xf32>, vector<1x128xf32> -> vector<2x128xf32>
    %9 = vector.shape_cast %8 : vector<2x128xf32> to vector<1x2x128xf32>
    %c0_5 = arith.constant 0 : index
    %c0_6 = arith.constant 0 : index
    %c0_7 = arith.constant 0 : index
    %10 = vector.load %arg3[%c0_5, %c0_6, %c0_7] : memref<1x2x128xf32, #tpu.memory_space<vmem>>, vector<1x2x128xf32>
    tpu.vector_store %arg3[%c0_5, %c0_6, %c0_7], %9 {strides = array<i32>} : memref<1x2x128xf32, #tpu.memory_space<vmem>>, vector<1x2x128xf32>,
    return
  }
  func.func @transform_0(%arg0: i32) -> (i32, i32) {
    %c0_i32 = arith.constant 0 : i32
    %c0_i32_0 = arith.constant 0 : i32
    return %arg0, %c0_i32 : i32, i32
  }
  func.func @transform_1(%arg0: i32) -> (i32, i32) {
    %c0_i32 = arith.constant 0 : i32
    %c0_i32_0 = arith.constant 0 : i32
    %c0_i32_1 = arith.constant 0 : i32
    return %c0_i32, %c0_i32_0 : i32, i32
  }
  func.func @transform_2(%arg0: i32) -> (i32, i32, i32) {
    %c0_i32 = arith.constant 0 : i32
    %c0_i32_0 = arith.constant 0 : i32
    %c0_i32_1 = arith.constant 0 : i32
    return %arg0, %c0_i32, %c0_i32_0 : i32, i32, i32
  }
}

</mosaic_0001>

<llo_original>
// kernel: tpu_custom_call.1
$region0: #{tpu_custom_call.1}
  #allocation0 [shape = 'u32[]', space=smem, size = 0x4, offset = 0x4, fixed_abs, tag = 'smem constant byte address 0x4 - core index']
  #allocation1 [shape = 'u32[144,128]{1,0:T(1,128)}', space=vmem, size = 0x12000, scoped, tag = 'internal scratch']
  %s0 = inlined_call_operand.vmem [shape: f32[512,36], index: 0, kind: input, shape index: {}]
  %s1 = inlined_call_operand.vmem [shape: f32[36,128], index: 1, kind: input, shape index: {}]
  %s2 = inlined_call_operand.hbm [shape: f32[4,2,128], index: 2, kind: output, shape index: {}]
  %s3 = sld [smem:[#allocation0]]
  $region41: #{tpu_custom_call.1} parent=0
    _
  %s5 = ssub.s32 1, %s3
  %s6 = scalar_select 0, %s5, %s3
  $region1: #{tpu_custom_call.1} parent=0
    #allocation2 [shape = 'u8[2048]{0}', space=vmem, size = 0x800, scoped, tag = 'output window, operand 0']
    #allocation3 [shape = 's32[2]{0}', space=sflag, size = 0x8, scoped, tag = 'scoped memory for tpu_custom_call.1']
    %7 = vsyncpa [#allocation3], 0
    %s8 = scalar_lea.sflag [#allocation3], 1
    %9 = vsyncpa %s8, 0
    loop: start=0, step=1, limit=6
    $region2: #{tpu_custom_call.1} parent=1 // loop_pre_header
      _
    $region3: #{tpu_custom_call.1} parent=1 // loop_header
      %s11 = sphi 0, %s15
      %p12 = scmp.ge.s32.totalorder %s11, 6
      %s21 = sphi 0, %s23
      %s24 = sphi 0, %s21
      %s25 = sphi 0, %s24
      %s41 = sphi 0, %s25
      %s45 = sphi 0, %s45
      %s47 = sphi 0, %s45
      %s48 = sphi 0, %s47
      %s62 = sphi 0, %s48
      %s68 = sphi 0, %s70
      %s71 = sphi 0, %s68
      %s72 = sphi 0, %s71
      %s88 = sphi 0, %s72
    $region4: #{tpu_custom_call.1} parent=1 // loop_header_branch
      %14 = sbr.rel (%p12) target = $region8
    $region5: #{tpu_custom_call.1} parent=1 // loop_body
      %s16 = ssub.s32 %s11, 1
      %s17 = ssub.s32 %s11, 2
      %s18 = sadd.s32 %s11, 1
      %s19 = ssub.s32 %s11, %s18
      %p20 = scmp.eq.s32.totalorder %s19, 0
      %s22 = sadd.s32 %s21, 1
      %s23 = scalar_select %p20, %s21, %s22
      %p26 = pneg %p20
      %p27 = scmp.eq.s32.totalorder %s11, 3
      %p28 = por %p26, %p27
      %p29 = scmp.ne.s32.totalorder %s21, %s24
      %p30 = scmp.eq.s32.totalorder %s11, 0
      %p31 = por %p29, %p30
      %p32 = scmp.ne.s32.totalorder %s21, %s24
      %p33 = scmp.eq.s32.totalorder %s16, 3
      %p34 = por %p32, %p33
      %p35 = scmp.ne.s32.totalorder %s24, %s25
      %p36 = scmp.eq.s32.totalorder %s16, 0
      %p37 = por %p35, %p36
      %p38 = scmp.ne.s32.totalorder %s24, %s25
      %p39 = scmp.eq.s32.totalorder %s17, 3
      %p40 = por %p38, %p39
      %p42 = scmp.ne.s32.totalorder %s25, %s41
      %p43 = scmp.eq.s32.totalorder %s17, 0
      %p44 = por %p42, %p43
      %s46 = sadd.s32 %s45, 1
      %p49 = scmp.eq.s32.totalorder %s11, 3
      %p50 = scmp.ne.s32.totalorder %s45, %s47
      %p51 = scmp.eq.s32.totalorder %s11, 0
      %p52 = por %p50, %p51
      %p53 = scmp.ne.s32.totalorder %s45, %s47
      %p54 = scmp.eq.s32.totalorder %s16, 3
      %p55 = por %p53, %p54
      %p56 = scmp.ne.s32.totalorder %s47, %s48
      %p57 = scmp.eq.s32.totalorder %s16, 0
      %p58 = por %p56, %p57
      %p59 = scmp.ne.s32.totalorder %s47, %s48
      %p60 = scmp.eq.s32.totalorder %s17, 3
      %p61 = por %p59, %p60
      %p63 = scmp.ne.s32.totalorder %s48, %s62
      %p64 = scmp.eq.s32.totalorder %s17, 0
      %p65 = por %p63, %p64
      %s66 = ssub.s32 %s11, %s18
      %p67 = scmp.eq.s32.totalorder %s66, 0
      %s69 = sadd.s32 %s68, 1
      %s70 = scalar_select %p67, %s68, %s69
      %p73 = pneg %p67
      %p74 = scmp.eq.s32.totalorder %s11, 3
      %p75 = por %p73, %p74
      %p76 = scmp.ne.s32.totalorder %s68, %s71
      %p77 = scmp.eq.s32.totalorder %s11, 0
      %p78 = por %p76, %p77
      %p79 = scmp.ne.s32.totalorder %s68, %s71
      %p80 = scmp.eq.s32.totalorder %s16, 3
      %p81 = por %p79, %p80
      %p82 = scmp.ne.s32.totalorder %s71, %s72
      %p83 = scmp.eq.s32.totalorder %s16, 0
      %p84 = por %p82, %p83
      %p85 = scmp.ne.s32.totalorder %s71, %s72
      %p86 = scmp.eq.s32.totalorder %s17, 3
      %p87 = por %p85, %p86
      %p89 = scmp.ne.s32.totalorder %s72, %s88
      %p90 = scmp.eq.s32.totalorder %s17, 0
      %p91 = por %p89, %p90
      %p92 = scmp.le.s32.totalorder 1, %s11
      %p93 = scmp.lt.s32.totalorder %s11, 5
      %p94 = pnand %p92, %p93
      %p95 = pneg %p94
      // Predicated region
      $region9: #{tpu_custom_call.1} parent=5 // pred_check
        _
      $region10: #{tpu_custom_call.1} parent=5 // pred_check_branch
        %97 = sbr.rel (%p94) target = $region12
      $region11: #{tpu_custom_call.1} parent=5 // pred_region
        %s98 = ssub.s32 %s11, 1
        // Predicated region
        $region13: #{tpu_custom_call.1} parent=11 // pred_check
          %p99 = pneg %p58
        $region14: #{tpu_custom_call.1} parent=11 // pred_check_branch
          %101 = sbr.rel (%p99) target = $region16
        $region15: #{tpu_custom_call.1} parent=11 // pred_region
          _
        $region16: #{tpu_custom_call.1} parent=11 // pred_fallthru
          _
      $region12: #{tpu_custom_call.1} parent=5 // pred_fallthru
        _
      %p102 = scmp.lt.s32.totalorder %s11, 4
      // Predicated region
      $region17: #{tpu_custom_call.1} parent=5 // pred_check
        %p103 = pneg %p102
      $region18: #{tpu_custom_call.1} parent=5 // pred_check_branch
        %105 = sbr.rel (%p103) target = $region20
      $region19: #{tpu_custom_call.1} parent=5 // pred_region
        // Predicated region
        $region21: #{tpu_custom_call.1} parent=19 // pred_check
          %p106 = pneg %p31
        $region22: #{tpu_custom_call.1} parent=19 // pred_check_branch
          %108 = sbr.rel (%p106) target = $region24
        $region23: #{tpu_custom_call.1} parent=19 // pred_region
          %s109 = smul.u32 16, %s11
          %p110 = scmp.lt.s32.totalorder %s109, 63
          %s111 = scalar_select %p110, %s109, 63
          %s112 = smul.addr %s111, 8
          %s113 = scalar_lea.vmem %s0, %s112
          %s114 = smul.u32 16, %s11
        $region24: #{tpu_custom_call.1} parent=19 // pred_fallthru
          _
      $region20: #{tpu_custom_call.1} parent=5 // pred_fallthru
        _
      %p115 = scmp.le.s32.totalorder 1, %s11
      %p116 = scmp.lt.s32.totalorder %s11, 5
      %p117 = pnand %p115, %p116
      %p118 = pneg %p117
      // Predicated region
      $region25: #{tpu_custom_call.1} parent=5 // pred_check
        _
      $region26: #{tpu_custom_call.1} parent=5 // pred_check_branch
        %120 = sbr.rel (%p117) target = $region28
      $region27: #{tpu_custom_call.1} parent=5 // pred_region
        %s121 = ssub.s32 %s11, 1
        %s122 = smul.u32 16, %s16
        %p123 = scmp.lt.s32.totalorder %s122, 63
        %s124 = scalar_select %p123, %s122, 63
        %s125 = smul.addr %s124, 8
        %s126 = scalar_lea.vmem %s0, %s125
        %p127 = pneg %p37
        %p128 = pneg %p34
        %p129 = pneg %p58
        %p130 = pneg %p55
        %p131 = pneg %p84
        %p132 = pneg %p81
        %s133 = sand.u32 %s71, 1
        %s134 = scalar_lea.sflag [#allocation3], %s133
        %s135 = sand.u32 %s71, 1
        %s136 = smul.addr %s135, 2
        %s137 = scalar_lea.vmem [#allocation2], %s136
        %s138 = smul.u32 16, %s16
        %p139 = scmp.lt.s32.totalorder %s138, 63
        %s140 = scalar_select %p139, %s138, 63
        %s141 = smul.addr %s140, 8
        %s142 = scalar_lea.vmem %s0, %s141
        %s143 = smul.u32 16, %s16
        %v144 = vld [vmem:[%s142] sm:$0xff]
        %v145 = vld [vmem:[%s142 + $0x8] sm:$0xff]
        %v146 = vld [vmem:[%s142 + $0x10] sm:$0xff]
        %v147 = vld [vmem:[%s142 + $0x18] sm:$0xff]
        %v148 = vld [vmem:[%s142 + $0x20] sm:$0xff]
        %v149 = vld [vmem:[%s142 + $0x28] sm:$0xff]
        %v150 = vld [vmem:[%s142 + $0x30] sm:$0xff]
        %v151 = vld [vmem:[%s142 + $0x38] sm:$0xff]
        %v152 = vld [vmem:[%s142 + $0x40] sm:$0xff]
        %v153 = vld [vmem:[%s142 + $0x48] sm:$0xff]
        %v154 = vld [vmem:[%s142 + $0x50] sm:$0xff]
        %v155 = vld [vmem:[%s142 + $0x58] sm:$0xff]
        %v156 = vld [vmem:[%s142 + $0x60] sm:$0xff]
        %v157 = vld [vmem:[%s142 + $0x68] sm:$0xff]
        %v158 = vld [vmem:[%s142 + $0x70] sm:$0xff]
        %v159 = vld [vmem:[%s142 + $0x78] sm:$0xff]
        %v160 = vld [vmem:[%s1] sm:$0xff]
        %v161 = vld [vmem:[%s1 + $0x8] sm:$0xff]
        %v162 = vld [vmem:[%s1 + $0x10] sm:$0xff]
        %v163 = vld [vmem:[%s1 + $0x18] sm:$0xff]
        %v164 = vld [vmem:[%s1 + $0x20] sm:$0xf]
        %vm165 = vcmask 293888
        %v167 = vsel %vm165, %v144, 0
        %v170 = vsel %vm165, %v145, 0
        %v173 = vsel %vm165, %v146, 0
        %v176 = vsel %vm165, %v147, 0
        %v179 = vsel %vm165, %v148, 0
        %v182 = vsel %vm165, %v149, 0
        %v185 = vsel %vm165, %v150, 0
        %v188 = vsel %vm165, %v151, 0
        %v191 = vsel %vm165, %v152, 0
        %v194 = vsel %vm165, %v153, 0
        %v197 = vsel %vm165, %v154, 0
        %v200 = vsel %vm165, %v155, 0
        %v203 = vsel %vm165, %v156, 0
        %v206 = vsel %vm165, %v157, 0
        %v209 = vsel %vm165, %v158, 0
        %v212 = vsel %vm165, %v159, 0
        %vm214 = vcmask 1043456
        %v216 = vsel %vm214, %v164, 0
        %218 = vmatprep.subr.mxu0 0.0
        %219 = vmatpush1.msra.mxu0 %v160
        %220 = vmatprep.subr.mxu0 0.0
        %221 = vmatpush1.msra.mxu0 %v161
        %222 = vmatprep.subr.mxu0 0.0
        %223 = vmatpush1.msra.mxu0 %v162
        %224 = vmatprep.subr.mxu0 0.0
        %225 = vmatpush1.msra.mxu0 %v163
        %226 = vmatprep.subr.mxu0 0.0
        %227 = vmatpush1.msra.mxu0 %v216
        %228 = vmatprep.subr.mxu0 0.0
        %229 = vmatpush1.msra.mxu0 0.0
        %230 = vmatprep.subr.mxu0 0.0
        %231 = vmatpush1.msra.mxu0 0.0
        %232 = vmatprep.subr.mxu0 0.0
        %233 = vmatpush1.msra.mxu0 0.0
        %234 = vmatprep.subr.mxu0 0.0
        %235 = vmatpush1.msra.mxu0 0.0
        %236 = vmatprep.subr.mxu0 0.0
        %237 = vmatpush1.msra.mxu0 0.0
        %238 = vmatprep.subr.mxu0 0.0
        %239 = vmatpush1.msra.mxu0 0.0
        %240 = vmatprep.subr.mxu0 0.0
        %241 = vmatpush1.msra.mxu0 0.0
        %242 = vmatprep.subr.mxu0 0.0
        %243 = vmatpush1.msra.mxu0 0.0
        %244 = vmatprep.subr.mxu0 0.0
        %245 = vmatpush1.msra.mxu0 0.0
        %246 = vmatprep.subr.mxu0 0.0
        %247 = vmatpush1.msra.mxu0 0.0
        %248 = vmatprep.subr.mxu0 0.0
        %249 = vmatpush1.msra.mxu0 0.0
        %250 = vmatprep.subr.mxu0 0.0
        %251 = vmatpush1.msra.mxu0 0.0
        %252 = vmatprep.subr.mxu0 0.0
        %253 = vmatpush1.msra.mxu0 0.0
        %254 = vmatprep.subr.mxu0 0.0
        %255 = vmatpush1.msra.mxu0 0.0
        %256 = vmatprep.subr.mxu0 0.0
        %257 = vmatpush1.msra.mxu0 0.0
        %258 = vmatprep.subr.mxu0 0.0
        %259 = vmatpush1.msra.mxu0 0.0
        %260 = vmatprep.subr.mxu0 0.0
        %261 = vmatpush1.msra.mxu0 0.0
        %262 = vmatprep.subr.mxu0 0.0
        %263 = vmatpush1.msra.mxu0 0.0
        %264 = vmatprep.subr.mxu0 0.0
        %265 = vmatpush1.msra.mxu0 0.0
        %266 = vmatprep.subr.mxu0 0.0
        %267 = vmatpush1.msra.mxu0 0.0
        %268 = vmatprep.subr.mxu0 0.0
        %269 = vmatpush1.msra.mxu0 0.0
        %270 = vmatprep.subr.mxu0 0.0
        %271 = vmatpush1.msra.mxu0 0.0
        %272 = vmatprep.subr.mxu0 0.0
        %273 = vmatpush1.msra.mxu0 0.0
        %274 = vmatprep.subr.mxu0 0.0
        %275 = vmatpush1.msra.mxu0 0.0
        %276 = vmatprep.subr.mxu0 0.0
        %277 = vmatpush1.msra.mxu0 0.0
        %278 = vmatprep.subr.mxu0 0.0
        %279 = vmatpush1.msra.mxu0 0.0
        %280 = vmatprep.subr.mxu0 0.0
        %281 = vmatpush1.msra.mxu0 0.0
        %282 = vmatprep.mubr.f32.mxu0 0.0
        %283 = vmatmul.mubr.f32.gmra.mrb[0].mxu0 %v167
        %v284 = vpop.f32.mrb[0].mxu0
        %v285 = vadd.f32 0.0, %v284
        %v286 = vpop.f32.mrb[0].mxu0
        %287 = vmatprep.mubr.f32.mxu0 0.0
        %288 = vmatmul.mubr.f32.gmra.mrb[0].mxu0 %v170
        %v289 = vpop.f32.mrb[0].mxu0
        %v290 = vadd.f32 0.0, %v289
        %v291 = vpop.f32.mrb[0].mxu0
        %292 = vmatprep.mubr.f32.mxu0 0.0
        %293 = vmatmul.mubr.f32.gmra.mrb[0].mxu0 %v173
        %v294 = vpop.f32.mrb[0].mxu0
        %v295 = vadd.f32 0.0, %v294
        %v296 = vpop.f32.mrb[0].mxu0
        %297 = vmatprep.mubr.f32.mxu0 0.0
        %298 = vmatmul.mubr.f32.gmra.mrb[0].mxu0 %v176
        %v299 = vpop.f32.mrb[0].mxu0
        %v300 = vadd.f32 0.0, %v299
        %v301 = vpop.f32.mrb[0].mxu0
        %302 = vmatprep.mubr.f32.mxu0 0.0
        %303 = vmatmul.mubr.f32.gmra.mrb[0].mxu0 %v179
        %v304 = vpop.f32.mrb[0].mxu0
        %v305 = vadd.f32 0.0, %v304
        %v306 = vpop.f32.mrb[0].mxu0
        %307 = vmatprep.mubr.f32.mxu0 0.0
        %308 = vmatmul.mubr.f32.gmra.mrb[0].mxu0 %v182
        %v309 = vpop.f32.mrb[0].mxu0
        %v310 = vadd.f32 0.0, %v309
        %v311 = vpop.f32.mrb[0].mxu0
        %312 = vmatprep.mubr.f32.mxu0 0.0
        %313 = vmatmul.mubr.f32.gmra.mrb[0].mxu0 %v185
        %v314 = vpop.f32.mrb[0].mxu0
        %v315 = vadd.f32 0.0, %v314
        %v316 = vpop.f32.mrb[0].mxu0
        %317 = vmatprep.mubr.f32.mxu0 0.0
        %318 = vmatmul.mubr.f32.gmra.mrb[0].mxu0 %v188
        %v319 = vpop.f32.mrb[0].mxu0
        %v320 = vadd.f32 0.0, %v319
        %v321 = vpop.f32.mrb[0].mxu0
        %322 = vmatprep.mubr.f32.mxu0 0.0
        %323 = vmatmul.mubr.f32.gmra.mrb[0].mxu0 %v191
        %v324 = vpop.f32.mrb[0].mxu0
        %v325 = vadd.f32 0.0, %v324
        %v326 = vpop.f32.mrb[0].mxu0
        %327 = vmatprep.mubr.f32.mxu0 0.0
        %328 = vmatmul.mubr.f32.gmra.mrb[0].mxu0 %v194
        %v329 = vpop.f32.mrb[0].mxu0
        %v330 = vadd.f32 0.0, %v329
        %v331 = vpop.f32.mrb[0].mxu0
        %332 = vmatprep.mubr.f32.mxu0 0.0
        %333 = vmatmul.mubr.f32.gmra.mrb[0].mxu0 %v197
        %v334 = vpop.f32.mrb[0].mxu0
        %v335 = vadd.f32 0.0, %v334
        %v336 = vpop.f32.mrb[0].mxu0
        %337 = vmatprep.mubr.f32.mxu0 0.0
        %338 = vmatmul.mubr.f32.gmra.mrb[0].mxu0 %v200
        %v339 = vpop.f32.mrb[0].mxu0
        %v340 = vadd.f32 0.0, %v339
        %v341 = vpop.f32.mrb[0].mxu0
        %342 = vmatprep.mubr.f32.mxu0 0.0
        %343 = vmatmul.mubr.f32.gmra.mrb[0].mxu0 %v203
        %v344 = vpop.f32.mrb[0].mxu0
        %v345 = vadd.f32 0.0, %v344
        %v346 = vpop.f32.mrb[0].mxu0
        %347 = vmatprep.mubr.f32.mxu0 0.0
        %348 = vmatmul.mubr.f32.gmra.mrb[0].mxu0 %v206
        %v349 = vpop.f32.mrb[0].mxu0
        %v350 = vadd.f32 0.0, %v349
        %v351 = vpop.f32.mrb[0].mxu0
        %352 = vmatprep.mubr.f32.mxu0 0.0
        %353 = vmatmul.mubr.f32.gmra.mrb[0].mxu0 %v209
        %v354 = vpop.f32.mrb[0].mxu0
        %v355 = vadd.f32 0.0, %v354
        %v356 = vpop.f32.mrb[0].mxu0
        %357 = vmatprep.mubr.f32.mxu0 0.0
        %358 = vmatmul.mubr.f32.gmra.mrb[0].mxu0 %v212
        %v359 = vpop.f32.mrb[0].mxu0
        %v360 = vadd.f32 0.0, %v359
        %v361 = vpop.f32.mrb[0].mxu0
        %362 = vdwg.mxu0
        %v363 = vadd.f32 %v285, %v290
        %v364 = vadd.f32 %v363, %v295
        %v365 = vadd.f32 %v364, %v300
        %v366 = vadd.f32 %v365, %v305
        %v367 = vadd.f32 %v366, %v310
        %v368 = vadd.f32 %v367, %v315
        %v369 = vadd.f32 %v368, %v320
        %v370 = vadd.f32 %v369, %v325
        %v371 = vadd.f32 %v370, %v330
        %v372 = vadd.f32 %v371, %v335
        %v373 = vadd.f32 %v372, %v340
        %v374 = vadd.f32 %v373, %v345
        %v375 = vadd.f32 %v374, %v350
        %v376 = vadd.f32 %v375, %v355
        %v377 = vadd.f32 %v376, %v360
        %v378 = vrot.slane %v377, 4
        %v379 = vadd.f32 %v377, %v378
        %v380 = vrot.slane %v379, 2
        %v381 = vadd.f32 %v379, %v380
        %v382 = vrot.slane %v381, 1
        %v383 = vadd.f32 %v381, %v382
        %v384 = vmul.f32 %v285, %v285
        %v385 = vmul.f32 %v290, %v290
        %v386 = vmul.f32 %v295, %v295
        %v387 = vmul.f32 %v300, %v300
        %v388 = vmul.f32 %v305, %v305
        %v389 = vmul.f32 %v310, %v310
        %v390 = vmul.f32 %v315, %v315
        %v391 = vmul.f32 %v320, %v320
        %v392 = vmul.f32 %v325, %v325
        %v393 = vmul.f32 %v330, %v330
        %v394 = vmul.f32 %v335, %v335
        %v395 = vmul.f32 %v340, %v340
        %v396 = vmul.f32 %v345, %v345
        %v397 = vmul.f32 %v350, %v350
        %v398 = vmul.f32 %v355, %v355
        %v399 = vmul.f32 %v360, %v360
        %v400 = vadd.f32 %v384, %v385
        %v401 = vadd.f32 %v400, %v386
        %v402 = vadd.f32 %v401, %v387
        %v403 = vadd.f32 %v402, %v388
        %v404 = vadd.f32 %v403, %v389
        %v405 = vadd.f32 %v404, %v390
        %v406 = vadd.f32 %v405, %v391
        %v407 = vadd.f32 %v406, %v392
        %v408 = vadd.f32 %v407, %v393
        %v409 = vadd.f32 %v408, %v394
        %v410 = vadd.f32 %v409, %v395
        %v411 = vadd.f32 %v410, %v396
        %v412 = vadd.f32 %v411, %v397
        %v413 = vadd.f32 %v412, %v398
        %v414 = vadd.f32 %v413, %v399
        %v415 = vrot.slane %v414, 4
        %v416 = vadd.f32 %v414, %v415
        %v417 = vrot.slane %v416, 2
        %v418 = vadd.f32 %v416, %v417
        %v419 = vrot.slane %v418, 1
        %v420 = vadd.f32 %v418, %v419
        %vm421 = vcmask 1040384
        %v422 = vsel %vm421, %v383, %v420
        %423 = vst [vmem:[%s137] sm:$0x3] %v422
        %s424 = sand.u32 %s71, 1
        %s425 = scalar_lea.sflag [#allocation3], %s424
        %s426 = sand.u32 %s71, 1
        %s427 = smul.addr %s426, 2
        %s428 = scalar_lea.vmem [#allocation2], %s427
        // Predicated region
        $region29: #{tpu_custom_call.1} parent=27 // pred_check
          %p429 = pneg %p81
        $region30: #{tpu_custom_call.1} parent=27 // pred_check_branch
          %431 = sbr.rel (%p429) target = $region32
        $region31: #{tpu_custom_call.1} parent=27 // pred_region
          %s433 = ssub.s32 32, 32
          %434 = vsyncadd %s425, %s433
          %s435 = smul.addr %s16, 32
          %s436 = scalar_lea.hbm %s2, %s435
          %s438 = sshll.u32 %s428, 4
          %s439 = int_to_ptr.vmem [resolvable:$true] %s438
          %441 = dma.vmem_to_hbm [thread:$0]  %s439, 32, %s436, %s425
        $region32: #{tpu_custom_call.1} parent=27 // pred_fallthru
          _
      $region28: #{tpu_custom_call.1} parent=5 // pred_fallthru
        _
      %p442 = scmp.le.s32.totalorder 2, %s11
      // Predicated region
      $region33: #{tpu_custom_call.1} parent=5 // pred_check
        %p443 = pneg %p442
      $region34: #{tpu_custom_call.1} parent=5 // pred_check_branch
        %445 = sbr.rel (%p443) target = $region36
      $region35: #{tpu_custom_call.1} parent=5 // pred_region
        %s446 = ssub.s32 %s11, 2
        // Predicated region
        $region37: #{tpu_custom_call.1} parent=35 // pred_check
          %p447 = pneg %p87
        $region38: #{tpu_custom_call.1} parent=35 // pred_check_branch
          %449 = sbr.rel (%p447) target = $region40
        $region39: #{tpu_custom_call.1} parent=35 // pred_region
          %s450 = sand.u32 %s72, 1
          %s451 = scalar_lea.sflag [#allocation3], %s450
          %s452 = sand.u32 %s72, 1
          %s453 = smul.addr %s452, 2
          %s454 = scalar_lea.vmem [#allocation2], %s453
          %455 = dma.done %s451, 32
        $region40: #{tpu_custom_call.1} parent=35 // pred_fallthru
          _
      $region36: #{tpu_custom_call.1} parent=5 // pred_fallthru
        _
    $region6: #{tpu_custom_call.1} parent=1 // loop_footer
      %s15 = sadd.s32 1, %s11
    $region7: #{tpu_custom_call.1} parent=1 // loop_footer_branch
      %10 = sbr.rel target = $region3
    $region8: #{tpu_custom_call.1} parent=1 // loop_exit
      _
    %456 = vsyncpa [#allocation3], 1
    %s457 = scalar_lea.sflag [#allocation3], 1
    %458 = vsyncpa %s457, 1

</llo_original>
